<compile_context>
chip_gen: v7x
topology: tpu7x:2x2x1
jax: 0.10.0
libtpu: 0.0.40
codegen_flags: <defaults>
</compile_context>

<pallas_src>
import functools
import math

import jax
import jax.numpy as jnp
import numpy as np
from jax import lax
from jax.experimental import pallas as pl
from jax.experimental.pallas import tpu as pltpu


def _round_up(x, m):
    return ((x + m - 1) // m) * m


def _tpu_vmem_capacity_bytes():
    """Physical per-core VMEM, queried at trace time; conservative fallback."""
    try:
        return int(pltpu.get_tpu_info().vmem_capacity_bytes)
    except Exception:
        return 64 * 1024 * 1024  # v7x per-TC VMEM (smallest of v5e/v6e/v7x)


def _pick_row_tile(batch, dim, itemsize, vmem_cap):
    """Largest 128-multiple row tile whose per-tile working set fits the budget.

    Per-row working set (lane-padded D):
      * x tile, double-buffered by the BlockSpec pipeline:  2 * itemsize * Dp
      * f32 temps inside the kernel (x32 and x*x):          2 * 4 * Dp
      * (TB,1) f32 output block (lane-padded), 2 buffers:   ~128 B + misc
    """
    dim_pad = _round_up(dim, 128)
    per_row = dim_pad * (2 * itemsize + 8) + 192
    budget = min(vmem_cap // 2, 28 * 1024 * 1024)   # stays safe on v7x's 64 MiB
    tb = max(128, (budget // per_row) // 128 * 128)
    if batch >= 256:
        # Guarantee >= 2 grid steps so the "parallel" axis uses both v7x TCs.
        tb = min(tb, _round_up(pl.cdiv(batch, 2), 128))
    tb = min(tb, _round_up(batch, 128))
    return tb


def _scores_kernel(x_ref, w_ref, ones_ref, scores_ref):
    """One batch tile: scores = (x . w_n) / max(||x||, eps).

    Both lane-axis reductions run on the MXU (the XLU stays idle); the row
    normalization is fused via rsqrt on the EUP slot, so no x_n tile is ever
    materialized.
    """
    x32 = x_ref[...].astype(jnp.float32)           # (TB, D); no-op for f32 input
    dot = jnp.dot(x32, w_ref[...], preferred_element_type=jnp.float32)        # (TB,1)
    xsq = jnp.dot(x32 * x32, ones_ref[...], preferred_element_type=jnp.float32)
    # 1 / max(||x||, 1e-12); the min() caps the ||x|| -> 0 case (rsqrt -> inf).
    inv_norm = jnp.minimum(lax.rsqrt(xsq), 1e12)
    scores_ref[...] = dot * inv_norm


def _loss_kernel(scores_ref, label_ref, out_ref, *, r_real, r_fake, alpha,
                 class_weight, apply_class_weight, batch, block_rows):
    """Lane-dense margin + softplus + class-weight epilogue; accumulates sum(loss)."""
    i = pl.program_id(0)

    @pl.when(i == 0)
    def _():
        out_ref[...] = jnp.zeros_like(out_ref)

    s = scores_ref[...]                            # (TR, 128) f32, lane-dense
    lab = label_ref[...]                           # (TR, 128) int32 (-1 == no label)
    row = lax.broadcasted_iota(jnp.int32, s.shape, 0)
    col = lax.broadcasted_iota(jnp.int32, s.shape, 1)
    idx = (i * block_rows + row) * 128 + col       # flat batch index
    valid = idx < batch

    is_real = lab == 1
    is_fake = lab == 0
    # Fused margin:  real -> r_real - s ; fake -> s - r_fake ; no label -> s
    sign = jnp.where(is_real, -1.0, 1.0)
    off = jnp.where(is_real, r_real, jnp.where(is_fake, -r_fake, 0.0))
    m = sign * s + off

    # softplus(alpha * m), numerically stable (beta=1 -> matches nn.Softplus)
    z = alpha * m
    loss = jnp.maximum(z, 0.0) + jnp.log1p(jnp.exp(-jnp.abs(z)))

    if apply_class_weight:  # static: torch applies this only when x.size(0) > 4
        wgt = jnp.where(is_fake, class_weight[0],
                        jnp.where(is_real, class_weight[1], 1.0))
        loss = loss * wgt

    # Padded rows (possibly NaN from garbage edge-tile reads) contribute 0.
    loss = jnp.where(valid, loss, 0.0)
    part = jnp.sum(loss, axis=1, keepdims=True)            # lane reduce   (TR, 1)
    out_ref[...] += jnp.sum(part, axis=0, keepdims=True)   # sublane reduce (1, 1)


def ocsoftmax_forward(x, weight, label=None, *, r_real=0.9, r_fake=0.2,
                      alpha=20.0, class_weight=(1.0, 1.0)):
    """Returns (loss, final_scores) with the same semantics as OCSoftmax.forward."""
    B, D = x.shape
    C, D2 = weight.shape
    assert D == D2
    assert C == 1, "kernel assumes num_class == 1 (the module default)"

    eps = 1e-12
    # Hoisted weight normalization (one tiny (1, D) op, done once in XLA).
    w32 = weight.astype(jnp.float32)
    w_n = w32 / jnp.maximum(jnp.linalg.norm(w32, axis=1, keepdims=True), eps)
    w_col = w_n.reshape(D, 1)
    ones_col = jnp.ones((D, 1), jnp.float32)

    itemsize = jnp.dtype(x.dtype).itemsize
    vmem_cap = _tpu_vmem_capacity_bytes()
    TB = _pick_row_tile(B, D, itemsize, vmem_cap)
    G = pl.cdiv(B, TB)
    P = G * TB                                  # padded batch, multiple of 128
    vmem_limit = max(32 * 1024 * 1024,
                     min(vmem_cap * 3 // 4, 128 * 1024 * 1024))

    # Only for tiny batches (single block larger than the array): pad x with
    # zeros so the lone block is fully in-bounds.  Copy cost is negligible.
    x_in = jnp.pad(x, ((0, TB - B), (0, 0))) if B < TB else x

    cost = pl.CostEstimate(
        flops=5 * B * D,                 # two (TB,D)x(D,1) matmuls + x*x
        transcendentals=B,               # rsqrt per row
        bytes_accessed=B * D * itemsize + P * 4 + 2 * D * 4,
    )

    scores_pad = pl.pallas_call(
        _scores_kernel,
        grid=(G,),
        out_shape=jax.ShapeDtypeStruct((P, 1), jnp.float32),
        in_specs=[
            pl.BlockSpec((TB, D), lambda i: (i, 0)),   # x tile (native dtype)
            pl.BlockSpec((D, 1), lambda i: (0, 0)),    # unit-norm weight column
            pl.BlockSpec((D, 1), lambda i: (0, 0)),    # ones column (for ||x||^2)
        ],
        out_specs=pl.BlockSpec((TB, 1), lambda i: (i, 0)),
        compiler_params=pltpu.CompilerParams(
            dimension_semantics=("parallel",),         # both TCs on v7x
            vmem_limit_bytes=vmem_limit,
        ),
        cost_estimate=cost,
    )(x_in, w_col, ones_col)

    # Labels: -1 sentinel == "no label" (margin & class weight become no-ops);
    # padded rows also get -1 (they are masked out in the loss kernel anyway).
    if label is None:
        lab = jnp.full((B,), -1, dtype=jnp.int32)
    else:
        lab = jnp.asarray(label, dtype=jnp.int32).reshape(B)
    lab_pad = jnp.pad(lab, (0, P - B), constant_values=-1)

    # Free relayout in HBM: a (P,1) column and a (P/128,128) matrix have the
    # same linear element order, so the epilogue kernel sees fully lane-dense
    # vregs (128 active lanes instead of 1).
    R = P // 128
    scores_2d = scores_pad.reshape(R, 128)
    labels_2d = lab_pad.reshape(R, 128)

    TR = R if R <= 2048 else 2048
    G2 = pl.cdiv(R, TR)

    loss_kernel = functools.partial(
        _loss_kernel,
        r_real=float(r_real), r_fake=float(r_fake), alpha=float(alpha),
        class_weight=(float(class_weight[0]), float(class_weight[1])),
        apply_class_weight=(B > 4),
        batch=B, block_rows=TR,
    )

    loss_sum = pl.pallas_call(
        loss_kernel,
        grid=(G2,),
        out_shape=jax.ShapeDtypeStruct((1, 1), jnp.float32),
        in_specs=[
            pl.BlockSpec((TR, 128), lambda i: (i, 0)),
            pl.BlockSpec((TR, 128), lambda i: (i, 0)),
        ],
        out_specs=pl.BlockSpec((1, 1), lambda i: (0, 0)),
        compiler_params=pltpu.CompilerParams(
            dimension_semantics=("arbitrary",),        # accumulated output
        ),
    )(scores_2d, labels_2d)[0, 0]

    if label is None:
        # torch: loss = loss.sum(); final_scores = scores
        return loss_sum, scores_pad[:B]
    # torch: loss = loss.mean() over the (B, C) loss tensor; final_scores = None
    return loss_sum / (B * C), None


def init_ocsoftmax_weight(key, num_class, embedding_size):
    """Deterministic re-implementation of the torch init:
    kaiming_uniform_(w, a=0.25) then renorm_(2, dim=1, 1e-5).mul_(1e5)."""
    a = 0.25
    gain = math.sqrt(2.0 / (1.0 + a * a))
    fan_in = embedding_size
    bound = gain * math.sqrt(3.0 / fan_in)
    w = jax.random.uniform(key, (num_class, embedding_size), jnp.float32,
                           minval=-bound, maxval=bound)
    maxnorm = 1e-5
    col_norm = jnp.sqrt(jnp.sum(w * w, axis=0, keepdims=True))
    scale = jnp.where(col_norm > maxnorm, maxnorm / (col_norm + 1e-7), 1.0)
    return w * scale * 1e5


def _reference_forward(x, weight, label, r_real=0.9, r_fake=0.2, alpha=20.0,
                       class_weight=(1.0, 1.0)):
    """Pure-JAX reference mirroring the torch code (label-provided path)."""
    eps = 1e-12
    wn = weight / jnp.maximum(jnp.linalg.norm(weight, axis=1, keepdims=True), eps)
    xn = x / jnp.maximum(jnp.linalg.norm(x, axis=1, keepdims=True), eps)
    scores = xn @ wn.T
    lab = label.reshape(-1, 1)
    m = jnp.where(lab == 1, r_real - scores, scores)
    m = jnp.where(lab == 0, m - r_fake, m)
    loss = jax.nn.softplus(alpha * m)
    if x.shape[0] > 4:
        loss = jnp.where(lab == 0, loss * class_weight[0], loss)
        loss = jnp.where(lab == 1, loss * class_weight[1], loss)
    return jnp.mean(loss), scores


if __name__ == "__main__":
    key = jax.random.PRNGKey(0)
    kw, kx, kl, kx2, kl2 = jax.random.split(key, 5)

    # Tolerances are 3e-3: the reductions run on the MXU and rsqrt on the EUP,
    # so results are f32-accurate but not bit-exact vs. the XLA reference.
    TOL = dict(rtol=3e-3, atol=3e-3)

    # --- small case: batch > 4 so the class-weight branch is exercised ---
    B, D, C = 8, 32, 1
    weight = init_ocsoftmax_weight(kw, C, D)
    x = jax.random.normal(kx, (B, D), dtype=jnp.float32)
    label = jax.random.bernoulli(kl, 0.5, (B,)).astype(jnp.int32)

    loss, final_scores = ocsoftmax_forward(x, weight, label)
    loss = jax.block_until_ready(loss)
    assert final_scores is None
    ref_loss, ref_scores = _reference_forward(x, weight, label)
    np.testing.assert_allclose(np.asarray(loss), np.asarray(ref_loss), **TOL)

    # label=None path: (sum loss, scores)
    loss_none, scores_none = ocsoftmax_forward(x, weight, None)
    jax.block_until_ready((loss_none, scores_none))
    np.testing.assert_allclose(np.asarray(scores_none), np.asarray(ref_scores), **TOL)
    ref_loss_none = jnp.sum(jax.nn.softplus(20.0 * ref_scores))
    np.testing.assert_allclose(np.asarray(loss_none), np.asarray(ref_loss_none), **TOL)

    # --- larger case: multi-tile grid + padded edge tile + non-trivial weights ---
    B2 = 600  # > one 384-row tile -> grid of 2, last tile padded, masked rows
    cw = (0.7, 1.3)
    x2 = jax.random.normal(kx2, (B2, D), dtype=jnp.float32)
    label2 = jax.random.bernoulli(kl2, 0.5, (B2,)).astype(jnp.int32)
    loss2, _ = ocsoftmax_forward(x2, weight, label2, class_weight=cw)
    loss2 = jax.block_until_ready(loss2)
    ref_loss2, _ = _reference_forward(x2, weight, label2, class_weight=cw)
    np.testing.assert_allclose(np.asarray(loss2), np.asarray(ref_loss2), **TOL)

    print("KERNEL_OK")
</pallas_src>

<mosaic_0001>
module attributes {stable_mosaic.version = 11 : i64} {
  func.func @_scores_kernel(%arg0: i32, %arg1: memref<128x32xf32, #tpu.memory_space<vmem>>, %arg2: memref<32x1xf32, #tpu.memory_space<vmem>>, %arg3: memref<32x1xf32, #tpu.memory_space<vmem>>, %arg4: memref<128x1xf32, #tpu.memory_space<vmem>>) attributes {dimension_semantics = [#tpu.dimension_semantics<parallel>], iteration_bounds = array<i64: 1>, scalar_prefetch = 0 : i64, scratch_operands = 0 : i64, tpu.core_type = #tpu.core_type<tc>, window_params = [{transform_indices = @transform_0, window_bounds = array<i64: 128, 32>}, {pipeline_mode = #tpu.pipeline_mode<synchronous>, transform_indices = @transform_1, window_bounds = array<i64: 32, 1>}, {pipeline_mode = #tpu.pipeline_mode<synchronous>, transform_indices = @transform_2, window_bounds = array<i64: 32, 1>}, {transform_indices = @transform_3, window_bounds = array<i64: 128, 1>}]} {
    %c0 = arith.constant 0 : index
    %c0_0 = arith.constant 0 : index
    %0 = vector.load %arg1[%c0, %c0_0] : memref<128x32xf32, #tpu.memory_space<vmem>>, vector<128x32xf32>
    %c0_1 = arith.constant 0 : index
    %c0_2 = arith.constant 0 : index
    %1 = vector.load %arg2[%c0_1, %c0_2] : memref<32x1xf32, #tpu.memory_space<vmem>>, vector<32x1xf32>
    %cst = arith.constant dense<0.000000e+00> : vector<128x1xf32>
    %2 = tpu.matmul %0, %1, %cst {dimension_numbers = #tpu.dot_dimension_numbers<[1], [0], [0], [1], [0, 0, 1, 1], [], []>} : vector<128x32xf32>, vector<32x1xf32>, vector<128x1xf32> -> vector<128x1xf32>
    %3 = arith.mulf %0, %0 : vector<128x32xf32>
    %c0_3 = arith.constant 0 : index
    %c0_4 = arith.constant 0 : index
    %4 = vector.load %arg3[%c0_3, %c0_4] : memref<32x1xf32, #tpu.memory_space<vmem>>, vector<32x1xf32>
    %cst_5 = arith.constant dense<0.000000e+00> : vector<128x1xf32>
    %5 = tpu.matmul %3, %4, %cst_5 {dimension_numbers = #tpu.dot_dimension_numbers<[1], [0], [0], [1], [0, 0, 1, 1], [], []>} : vector<128x32xf32>, vector<32x1xf32>, vector<128x1xf32> -> vector<128x1xf32>
    %6 = math.rsqrt %5 : vector<128x1xf32>
    %cst_6 = arith.constant 9.99999995E+11 : f32
    %7 = vector.broadcast %cst_6 : f32 to vector<128x1xf32>
    %8 = arith.minimumf %6, %7 : vector<128x1xf32>
    %9 = arith.mulf %2, %8 : vector<128x1xf32>
    %c0_7 = arith.constant 0 : index
    %c0_8 = arith.constant 0 : index
    %10 = vector.load %arg4[%c0_7, %c0_8] : memref<128x1xf32, #tpu.memory_space<vmem>>, vector<128x1xf32>
    tpu.vector_store %arg4[%c0_7, %c0_8], %9 {strides = array<i32>} : memref<128x1xf32, #tpu.memory_space<vmem>>, vector<128x1xf32>,
    return
  }
  func.func @transform_0(%arg0: i32) -> (i32, i32) {
    %c0_i32 = arith.constant 0 : i32
    %c0_i32_0 = arith.constant 0 : i32
    return %arg0, %c0_i32 : i32, i32
  }
  func.func @transform_1(%arg0: i32) -> (i32, i32) {
    %c0_i32 = arith.constant 0 : i32
    %c0_i32_0 = arith.constant 0 : i32
    %c0_i32_1 = arith.constant 0 : i32
    return %c0_i32, %c0_i32_0 : i32, i32
  }
  func.func @transform_2(%arg0: i32) -> (i32, i32) {
    %c0_i32 = arith.constant 0 : i32
    %c0_i32_0 = arith.constant 0 : i32
    %c0_i32_1 = arith.constant 0 : i32
    return %c0_i32, %c0_i32_0 : i32, i32
  }
  func.func @transform_3(%arg0: i32) -> (i32, i32) {
    %c0_i32 = arith.constant 0 : i32
    %c0_i32_0 = arith.constant 0 : i32
    return %arg0, %c0_i32 : i32, i32
  }
}

</mosaic_0001>

<llo_original>
// kernel: tpu_custom_call.1
$region0: #{tpu_custom_call.1}
  #allocation0 [shape = 'u32[]', space=smem, size = 0x4, offset = 0x4, fixed_abs, tag = 'smem constant byte address 0x4 - core index']
  #allocation1 [shape = 'u32[144,128]{1,0:T(1,128)}', space=vmem, size = 0x12000, scoped, tag = 'internal scratch']
  %s0 = inlined_call_operand.vmem [shape: f32[128,32], index: 0, kind: input, shape index: {}]
  %s1 = inlined_call_operand.vmem [shape: f32[32,1], index: 1, kind: input, shape index: {}]
  %s2 = inlined_call_operand.vmem [shape: f32[32,1], index: 2, kind: input, shape index: {}]
  %s3 = inlined_call_operand.vmem [shape: f32[128,1], index: 3, kind: output, shape index: {}]
  %s4 = sld [smem:[#allocation0]]
  $region22: #{tpu_custom_call.1} parent=0
    _
  %s6 = ssub.s32 1, %s4
  %s7 = scalar_select 0, %s6, %s4
  // Predicated region
  $region2: #{tpu_custom_call.1} parent=0 // pred_check
    _
  $region3: #{tpu_custom_call.1} parent=0 // pred_check_branch
    %9 = sbr.rel (0) target = $region5
  $region4: #{tpu_custom_call.1} parent=0 // pred_region
    _
  $region5: #{tpu_custom_call.1} parent=0 // pred_fallthru
    _
  // Predicated region
  $region6: #{tpu_custom_call.1} parent=0 // pred_check
    _
  $region7: #{tpu_custom_call.1} parent=0 // pred_check_branch
    %11 = sbr.rel (0) target = $region9
  $region8: #{tpu_custom_call.1} parent=0 // pred_region
    _
  $region9: #{tpu_custom_call.1} parent=0 // pred_fallthru
    _
  // Predicated region
  $region10: #{tpu_custom_call.1} parent=0 // pred_check
    _
  $region11: #{tpu_custom_call.1} parent=0 // pred_check_branch
    %13 = sbr.rel (0) target = $region13
  $region12: #{tpu_custom_call.1} parent=0 // pred_region
    _
  $region13: #{tpu_custom_call.1} parent=0 // pred_fallthru
    _
  %v14 = vld [vmem:[%s0] sm:$0xff]
  %v15 = vld [vmem:[%s0 + $0x8] sm:$0xff]
  %v16 = vld [vmem:[%s0 + $0x10] sm:$0xff]
  %v17 = vld [vmem:[%s0 + $0x18] sm:$0xff]
  %v18 = vld [vmem:[%s0 + $0x20] sm:$0xff]
  %v19 = vld [vmem:[%s0 + $0x28] sm:$0xff]
  %v20 = vld [vmem:[%s0 + $0x30] sm:$0xff]
  %v21 = vld [vmem:[%s0 + $0x38] sm:$0xff]
  %v22 = vld [vmem:[%s0 + $0x40] sm:$0xff]
  %v23 = vld [vmem:[%s0 + $0x48] sm:$0xff]
  %v24 = vld [vmem:[%s0 + $0x50] sm:$0xff]
  %v25 = vld [vmem:[%s0 + $0x58] sm:$0xff]
  %v26 = vld [vmem:[%s0 + $0x60] sm:$0xff]
  %v27 = vld [vmem:[%s0 + $0x68] sm:$0xff]
  %v28 = vld [vmem:[%s0 + $0x70] sm:$0xff]
  %v29 = vld [vmem:[%s0 + $0x78] sm:$0xff]
  %v30 = vld [vmem:[%s1] sm:$0xff]
  %v31 = vld [vmem:[%s1 + $0x8] sm:$0xff]
  %v32 = vld [vmem:[%s1 + $0x10] sm:$0xff]
  %v33 = vld [vmem:[%s1 + $0x18] sm:$0xff]
  %vm34 = vcmask 261120
  %v36 = vsel %vm34, %v14, 0
  %v39 = vsel %vm34, %v15, 0
  %v42 = vsel %vm34, %v16, 0
  %v45 = vsel %vm34, %v17, 0
  %v48 = vsel %vm34, %v18, 0
  %v51 = vsel %vm34, %v19, 0
  %v54 = vsel %vm34, %v20, 0
  %v57 = vsel %vm34, %v21, 0
  %v60 = vsel %vm34, %v22, 0
  %v63 = vsel %vm34, %v23, 0
  %v66 = vsel %vm34, %v24, 0
  %v69 = vsel %vm34, %v25, 0
  %v72 = vsel %vm34, %v26, 0
  %v75 = vsel %vm34, %v27, 0
  %v78 = vsel %vm34, %v28, 0
  %v81 = vsel %vm34, %v29, 0
  %83 = vmatprep.subr.mxu0 0.0
  %84 = vmatpush1.msra.mxu0 %v30
  %85 = vmatprep.subr.mxu0 0.0
  %86 = vmatpush1.msra.mxu0 %v31
  %87 = vmatprep.subr.mxu0 0.0
  %88 = vmatpush1.msra.mxu0 %v32
  %89 = vmatprep.subr.mxu0 0.0
  %90 = vmatpush1.msra.mxu0 %v33
  %91 = vmatprep.subr.mxu0 0.0
  %92 = vmatpush1.msra.mxu0 0.0
  %93 = vmatprep.subr.mxu0 0.0
  %94 = vmatpush1.msra.mxu0 0.0
  %95 = vmatprep.subr.mxu0 0.0
  %96 = vmatpush1.msra.mxu0 0.0
  %97 = vmatprep.subr.mxu0 0.0
  %98 = vmatpush1.msra.mxu0 0.0
  %99 = vmatprep.subr.mxu0 0.0
  %100 = vmatpush1.msra.mxu0 0.0
  %101 = vmatprep.subr.mxu0 0.0
  %102 = vmatpush1.msra.mxu0 0.0
  %103 = vmatprep.subr.mxu0 0.0
  %104 = vmatpush1.msra.mxu0 0.0
  %105 = vmatprep.subr.mxu0 0.0
  %106 = vmatpush1.msra.mxu0 0.0
  %107 = vmatprep.subr.mxu0 0.0
  %108 = vmatpush1.msra.mxu0 0.0
  %109 = vmatprep.subr.mxu0 0.0
  %110 = vmatpush1.msra.mxu0 0.0
  %111 = vmatprep.subr.mxu0 0.0
  %112 = vmatpush1.msra.mxu0 0.0
  %113 = vmatprep.subr.mxu0 0.0
  %114 = vmatpush1.msra.mxu0 0.0
  %115 = vmatprep.subr.mxu0 0.0
  %116 = vmatpush1.msra.mxu0 0.0
  %117 = vmatprep.subr.mxu0 0.0
  %118 = vmatpush1.msra.mxu0 0.0
  %119 = vmatprep.subr.mxu0 0.0
  %120 = vmatpush1.msra.mxu0 0.0
  %121 = vmatprep.subr.mxu0 0.0
  %122 = vmatpush1.msra.mxu0 0.0
  %123 = vmatprep.subr.mxu0 0.0
  %124 = vmatpush1.msra.mxu0 0.0
  %125 = vmatprep.subr.mxu0 0.0
  %126 = vmatpush1.msra.mxu0 0.0
  %127 = vmatprep.subr.mxu0 0.0
  %128 = vmatpush1.msra.mxu0 0.0
  %129 = vmatprep.subr.mxu0 0.0
  %130 = vmatpush1.msra.mxu0 0.0
  %131 = vmatprep.subr.mxu0 0.0
  %132 = vmatpush1.msra.mxu0 0.0
  %133 = vmatprep.subr.mxu0 0.0
  %134 = vmatpush1.msra.mxu0 0.0
  %135 = vmatprep.subr.mxu0 0.0
  %136 = vmatpush1.msra.mxu0 0.0
  %137 = vmatprep.subr.mxu0 0.0
  %138 = vmatpush1.msra.mxu0 0.0
  %139 = vmatprep.subr.mxu0 0.0
  %140 = vmatpush1.msra.mxu0 0.0
  %141 = vmatprep.subr.mxu0 0.0
  %142 = vmatpush1.msra.mxu0 0.0
  %143 = vmatprep.subr.mxu0 0.0
  %144 = vmatpush1.msra.mxu0 0.0
  %145 = vmatprep.subr.mxu0 0.0
  %146 = vmatpush1.msra.mxu0 0.0
  %147 = vmatprep.mubr.f32.mxu0 0.0
  %148 = vmatmul.mubr.f32.gmra.mrb[0].mxu0 %v36
  %v149 = vpop.f32.mrb[0].mxu0
  %v150 = vadd.f32 0.0, %v149
  %v151 = vpop.f32.mrb[0].mxu0
  %152 = vmatprep.mubr.f32.mxu0 0.0
  %153 = vmatmul.mubr.f32.gmra.mrb[0].mxu0 %v39
  %v154 = vpop.f32.mrb[0].mxu0
  %v155 = vadd.f32 0.0, %v154
  %v156 = vpop.f32.mrb[0].mxu0
  %157 = vmatprep.mubr.f32.mxu0 0.0
  %158 = vmatmul.mubr.f32.gmra.mrb[0].mxu0 %v42
  %v159 = vpop.f32.mrb[0].mxu0
  %v160 = vadd.f32 0.0, %v159
  %v161 = vpop.f32.mrb[0].mxu0
  %162 = vmatprep.mubr.f32.mxu0 0.0
  %163 = vmatmul.mubr.f32.gmra.mrb[0].mxu0 %v45
  %v164 = vpop.f32.mrb[0].mxu0
  %v165 = vadd.f32 0.0, %v164
  %v166 = vpop.f32.mrb[0].mxu0
  %167 = vmatprep.mubr.f32.mxu0 0.0
  %168 = vmatmul.mubr.f32.gmra.mrb[0].mxu0 %v48
  %v169 = vpop.f32.mrb[0].mxu0
  %v170 = vadd.f32 0.0, %v169
  %v171 = vpop.f32.mrb[0].mxu0
  %172 = vmatprep.mubr.f32.mxu0 0.0
  %173 = vmatmul.mubr.f32.gmra.mrb[0].mxu0 %v51
  %v174 = vpop.f32.mrb[0].mxu0
  %v175 = vadd.f32 0.0, %v174
  %v176 = vpop.f32.mrb[0].mxu0
  %177 = vmatprep.mubr.f32.mxu0 0.0
  %178 = vmatmul.mubr.f32.gmra.mrb[0].mxu0 %v54
  %v179 = vpop.f32.mrb[0].mxu0
  %v180 = vadd.f32 0.0, %v179
  %v181 = vpop.f32.mrb[0].mxu0
  %182 = vmatprep.mubr.f32.mxu0 0.0
  %183 = vmatmul.mubr.f32.gmra.mrb[0].mxu0 %v57
  %v184 = vpop.f32.mrb[0].mxu0
  %v185 = vadd.f32 0.0, %v184
  %v186 = vpop.f32.mrb[0].mxu0
  %187 = vmatprep.mubr.f32.mxu0 0.0
  %188 = vmatmul.mubr.f32.gmra.mrb[0].mxu0 %v60
  %v189 = vpop.f32.mrb[0].mxu0
  %v190 = vadd.f32 0.0, %v189
  %v191 = vpop.f32.mrb[0].mxu0
  %192 = vmatprep.mubr.f32.mxu0 0.0
  %193 = vmatmul.mubr.f32.gmra.mrb[0].mxu0 %v63
  %v194 = vpop.f32.mrb[0].mxu0
  %v195 = vadd.f32 0.0, %v194
  %v196 = vpop.f32.mrb[0].mxu0
  %197 = vmatprep.mubr.f32.mxu0 0.0
  %198 = vmatmul.mubr.f32.gmra.mrb[0].mxu0 %v66
  %v199 = vpop.f32.mrb[0].mxu0
  %v200 = vadd.f32 0.0, %v199
  %v201 = vpop.f32.mrb[0].mxu0
  %202 = vmatprep.mubr.f32.mxu0 0.0
  %203 = vmatmul.mubr.f32.gmra.mrb[0].mxu0 %v69
  %v204 = vpop.f32.mrb[0].mxu0
  %v205 = vadd.f32 0.0, %v204
  %v206 = vpop.f32.mrb[0].mxu0
  %207 = vmatprep.mubr.f32.mxu0 0.0
  %208 = vmatmul.mubr.f32.gmra.mrb[0].mxu0 %v72
  %v209 = vpop.f32.mrb[0].mxu0
  %v210 = vadd.f32 0.0, %v209
  %v211 = vpop.f32.mrb[0].mxu0
  %212 = vmatprep.mubr.f32.mxu0 0.0
  %213 = vmatmul.mubr.f32.gmra.mrb[0].mxu0 %v75
  %v214 = vpop.f32.mrb[0].mxu0
  %v215 = vadd.f32 0.0, %v214
  %v216 = vpop.f32.mrb[0].mxu0
  %217 = vmatprep.mubr.f32.mxu0 0.0
  %218 = vmatmul.mubr.f32.gmra.mrb[0].mxu0 %v78
  %v219 = vpop.f32.mrb[0].mxu0
  %v220 = vadd.f32 0.0, %v219
  %v221 = vpop.f32.mrb[0].mxu0
  %222 = vmatprep.mubr.f32.mxu0 0.0
  %223 = vmatmul.mubr.f32.gmra.mrb[0].mxu0 %v81
  %v224 = vpop.f32.mrb[0].mxu0
  %v225 = vadd.f32 0.0, %v224
  %v226 = vpop.f32.mrb[0].mxu0
  %227 = vdwg.mxu0
  %v228 = vmul.f32 %v14, %v14
  %v229 = vmul.f32 %v15, %v15
  %v230 = vmul.f32 %v16, %v16
  %v231 = vmul.f32 %v17, %v17
  %v232 = vmul.f32 %v18, %v18
  %v233 = vmul.f32 %v19, %v19
  %v234 = vmul.f32 %v20, %v20
  %v235 = vmul.f32 %v21, %v21
  %v236 = vmul.f32 %v22, %v22
  %v237 = vmul.f32 %v23, %v23
  %v238 = vmul.f32 %v24, %v24
  %v239 = vmul.f32 %v25, %v25
  %v240 = vmul.f32 %v26, %v26
  %v241 = vmul.f32 %v27, %v27
  %v242 = vmul.f32 %v28, %v28
  %v243 = vmul.f32 %v29, %v29
  %v244 = vld [vmem:[%s2] sm:$0xff]
  %v245 = vld [vmem:[%s2 + $0x8] sm:$0xff]
  %v246 = vld [vmem:[%s2 + $0x10] sm:$0xff]
  %v247 = vld [vmem:[%s2 + $0x18] sm:$0xff]
  %v249 = vsel %vm34, %v228, 0
  %v252 = vsel %vm34, %v229, 0
  %v255 = vsel %vm34, %v230, 0
  %v258 = vsel %vm34, %v231, 0
  %v261 = vsel %vm34, %v232, 0
  %v264 = vsel %vm34, %v233, 0
  %v267 = vsel %vm34, %v234, 0
  %v270 = vsel %vm34, %v235, 0
  %v273 = vsel %vm34, %v236, 0
  %v276 = vsel %vm34, %v237, 0
  %v279 = vsel %vm34, %v238, 0
  %v282 = vsel %vm34, %v239, 0
  %v285 = vsel %vm34, %v240, 0
  %v288 = vsel %vm34, %v241, 0
  %v291 = vsel %vm34, %v242, 0
  %v294 = vsel %vm34, %v243, 0
  %296 = vmatprep.subr.mxu0 0.0
  %297 = vmatpush1.msra.mxu0 %v244
  %298 = vmatprep.subr.mxu0 0.0
  %299 = vmatpush1.msra.mxu0 %v245
  %300 = vmatprep.subr.mxu0 0.0
  %301 = vmatpush1.msra.mxu0 %v246
  %302 = vmatprep.subr.mxu0 0.0
  %303 = vmatpush1.msra.mxu0 %v247
  %304 = vmatprep.subr.mxu0 0.0
  %305 = vmatpush1.msra.mxu0 0.0
  %306 = vmatprep.subr.mxu0 0.0
  %307 = vmatpush1.msra.mxu0 0.0
  %308 = vmatprep.subr.mxu0 0.0
  %309 = vmatpush1.msra.mxu0 0.0
  %310 = vmatprep.subr.mxu0 0.0
  %311 = vmatpush1.msra.mxu0 0.0
  %312 = vmatprep.subr.mxu0 0.0
  %313 = vmatpush1.msra.mxu0 0.0
  %314 = vmatprep.subr.mxu0 0.0
  %315 = vmatpush1.msra.mxu0 0.0
  %316 = vmatprep.subr.mxu0 0.0
  %317 = vmatpush1.msra.mxu0 0.0
  %318 = vmatprep.subr.mxu0 0.0
  %319 = vmatpush1.msra.mxu0 0.0
  %320 = vmatprep.subr.mxu0 0.0
  %321 = vmatpush1.msra.mxu0 0.0
  %322 = vmatprep.subr.mxu0 0.0
  %323 = vmatpush1.msra.mxu0 0.0
  %324 = vmatprep.subr.mxu0 0.0
  %325 = vmatpush1.msra.mxu0 0.0
  %326 = vmatprep.subr.mxu0 0.0
  %327 = vmatpush1.msra.mxu0 0.0
  %328 = vmatprep.subr.mxu0 0.0
  %329 = vmatpush1.msra.mxu0 0.0
  %330 = vmatprep.subr.mxu0 0.0
  %331 = vmatpush1.msra.mxu0 0.0
  %332 = vmatprep.subr.mxu0 0.0
  %333 = vmatpush1.msra.mxu0 0.0
  %334 = vmatprep.subr.mxu0 0.0
  %335 = vmatpush1.msra.mxu0 0.0
  %336 = vmatprep.subr.mxu0 0.0
  %337 = vmatpush1.msra.mxu0 0.0
  %338 = vmatprep.subr.mxu0 0.0
  %339 = vmatpush1.msra.mxu0 0.0
  %340 = vmatprep.subr.mxu0 0.0
  %341 = vmatpush1.msra.mxu0 0.0
  %342 = vmatprep.subr.mxu0 0.0
  %343 = vmatpush1.msra.mxu0 0.0
  %344 = vmatprep.subr.mxu0 0.0
  %345 = vmatpush1.msra.mxu0 0.0
  %346 = vmatprep.subr.mxu0 0.0
  %347 = vmatpush1.msra.mxu0 0.0
  %348 = vmatprep.subr.mxu0 0.0
  %349 = vmatpush1.msra.mxu0 0.0
  %350 = vmatprep.subr.mxu0 0.0
  %351 = vmatpush1.msra.mxu0 0.0
  %352 = vmatprep.subr.mxu0 0.0
  %353 = vmatpush1.msra.mxu0 0.0
  %354 = vmatprep.subr.mxu0 0.0
  %355 = vmatpush1.msra.mxu0 0.0
  %356 = vmatprep.subr.mxu0 0.0
  %357 = vmatpush1.msra.mxu0 0.0
  %358 = vmatprep.subr.mxu0 0.0
  %359 = vmatpush1.msra.mxu0 0.0
  %360 = vmatprep.mubr.f32.mxu0 0.0
  %361 = vmatmul.mubr.f32.gmra.mrb[0].mxu0 %v249
  %v362 = vpop.f32.mrb[0].mxu0
  %v363 = vadd.f32 0.0, %v362
  %v364 = vpop.f32.mrb[0].mxu0
  %365 = vmatprep.mubr.f32.mxu0 0.0
  %366 = vmatmul.mubr.f32.gmra.mrb[0].mxu0 %v252
  %v367 = vpop.f32.mrb[0].mxu0
  %v368 = vadd.f32 0.0, %v367
  %v369 = vpop.f32.mrb[0].mxu0
  %370 = vmatprep.mubr.f32.mxu0 0.0
  %371 = vmatmul.mubr.f32.gmra.mrb[0].mxu0 %v255
  %v372 = vpop.f32.mrb[0].mxu0
  %v373 = vadd.f32 0.0, %v372
  %v374 = vpop.f32.mrb[0].mxu0
  %375 = vmatprep.mubr.f32.mxu0 0.0
  %376 = vmatmul.mubr.f32.gmra.mrb[0].mxu0 %v258
  %v377 = vpop.f32.mrb[0].mxu0
  %v378 = vadd.f32 0.0, %v377
  %v379 = vpop.f32.mrb[0].mxu0
  %380 = vmatprep.mubr.f32.mxu0 0.0
  %381 = vmatmul.mubr.f32.gmra.mrb[0].mxu0 %v261
  %v382 = vpop.f32.mrb[0].mxu0
  %v383 = vadd.f32 0.0, %v382
  %v384 = vpop.f32.mrb[0].mxu0
  %385 = vmatprep.mubr.f32.mxu0 0.0
  %386 = vmatmul.mubr.f32.gmra.mrb[0].mxu0 %v264
  %v387 = vpop.f32.mrb[0].mxu0
  %v388 = vadd.f32 0.0, %v387
  %v389 = vpop.f32.mrb[0].mxu0
  %390 = vmatprep.mubr.f32.mxu0 0.0
  %391 = vmatmul.mubr.f32.gmra.mrb[0].mxu0 %v267
  %v392 = vpop.f32.mrb[0].mxu0
  %v393 = vadd.f32 0.0, %v392
  %v394 = vpop.f32.mrb[0].mxu0
  %395 = vmatprep.mubr.f32.mxu0 0.0
  %396 = vmatmul.mubr.f32.gmra.mrb[0].mxu0 %v270
  %v397 = vpop.f32.mrb[0].mxu0
  %v398 = vadd.f32 0.0, %v397
  %v399 = vpop.f32.mrb[0].mxu0
  %400 = vmatprep.mubr.f32.mxu0 0.0
  %401 = vmatmul.mubr.f32.gmra.mrb[0].mxu0 %v273
  %v402 = vpop.f32.mrb[0].mxu0
  %v403 = vadd.f32 0.0, %v402
  %v404 = vpop.f32.mrb[0].mxu0
  %405 = vmatprep.mubr.f32.mxu0 0.0
  %406 = vmatmul.mubr.f32.gmra.mrb[0].mxu0 %v276
  %v407 = vpop.f32.mrb[0].mxu0
  %v408 = vadd.f32 0.0, %v407
  %v409 = vpop.f32.mrb[0].mxu0
  %410 = vmatprep.mubr.f32.mxu0 0.0
  %411 = vmatmul.mubr.f32.gmra.mrb[0].mxu0 %v279
  %v412 = vpop.f32.mrb[0].mxu0
  %v413 = vadd.f32 0.0, %v412
  %v414 = vpop.f32.mrb[0].mxu0
  %415 = vmatprep.mubr.f32.mxu0 0.0
  %416 = vmatmul.mubr.f32.gmra.mrb[0].mxu0 %v282
  %v417 = vpop.f32.mrb[0].mxu0
  %v418 = vadd.f32 0.0, %v417
  %v419 = vpop.f32.mrb[0].mxu0
  %420 = vmatprep.mubr.f32.mxu0 0.0
  %421 = vmatmul.mubr.f32.gmra.mrb[0].mxu0 %v285
  %v422 = vpop.f32.mrb[0].mxu0
  %v423 = vadd.f32 0.0, %v422
  %v424 = vpop.f32.mrb[0].mxu0
  %425 = vmatprep.mubr.f32.mxu0 0.0
  %426 = vmatmul.mubr.f32.gmra.mrb[0].mxu0 %v288
  %v427 = vpop.f32.mrb[0].mxu0
  %v428 = vadd.f32 0.0, %v427
  %v429 = vpop.f32.mrb[0].mxu0
  %430 = vmatprep.mubr.f32.mxu0 0.0
  %431 = vmatmul.mubr.f32.gmra.mrb[0].mxu0 %v291
  %v432 = vpop.f32.mrb[0].mxu0
  %v433 = vadd.f32 0.0, %v432
  %v434 = vpop.f32.mrb[0].mxu0
  %435 = vmatprep.mubr.f32.mxu0 0.0
  %436 = vmatmul.mubr.f32.gmra.mrb[0].mxu0 %v294
  %v437 = vpop.f32.mrb[0].mxu0
  %v438 = vadd.f32 0.0, %v437
  %v439 = vpop.f32.mrb[0].mxu0
  %440 = vdwg.mxu0
  %v441 = vrsqrt.pop %v363
  %v442 = vrsqrt.pop %v368
  %v443 = vrsqrt.pop %v373
  %v444 = vrsqrt.pop %v378
  %v445 = vrsqrt.pop %v383
  %v446 = vrsqrt.pop %v388
  %v447 = vrsqrt.pop %v393
  %v448 = vrsqrt.pop %v398
  %v449 = vrsqrt.pop %v403
  %v450 = vrsqrt.pop %v408
  %v451 = vrsqrt.pop %v413
  %v452 = vrsqrt.pop %v418
  %v453 = vrsqrt.pop %v423
  %v454 = vrsqrt.pop %v428
  %v455 = vrsqrt.pop %v433
  %v456 = vrsqrt.pop %v438
  %v457 = vmin.f32 %v441, 1e+12
  %v458 = vmin.f32 %v442, 1e+12
  %v459 = vmin.f32 %v443, 1e+12
  %v460 = vmin.f32 %v444, 1e+12
  %v461 = vmin.f32 %v445, 1e+12
  %v462 = vmin.f32 %v446, 1e+12
  %v463 = vmin.f32 %v447, 1e+12
  %v464 = vmin.f32 %v448, 1e+12
  %v465 = vmin.f32 %v449, 1e+12
  %v466 = vmin.f32 %v450, 1e+12
  %v467 = vmin.f32 %v451, 1e+12
  %v468 = vmin.f32 %v452, 1e+12
  %v469 = vmin.f32 %v453, 1e+12
  %v470 = vmin.f32 %v454, 1e+12
  %v471 = vmin.f32 %v455, 1e+12
  %v472 = vmin.f32 %v456, 1e+12
  %v473 = vmul.f32 %v150, %v457
  %v474 = vmul.f32 %v155, %v458
  %v475 = vmul.f32 %v160, %v459
  %v476 = vmul.f32 %v165, %v460
  %v477 = vmul.f32 %v170, %v461
  %v478 = vmul.f32 %v175, %v462
  %v479 = vmul.f32 %v180, %v463
  %v480 = vmul.f32 %v185, %v464
  %v481 = vmul.f32 %v190, %v465
  %v482 = vmul.f32 %v195, %v466
  %v483 = vmul.f32 %v200, %v467
  %v484 = vmul.f32 %v205, %v468
  %v485 = vmul.f32 %v210, %v469
  %v486 = vmul.f32 %v215, %v470
  %v487 = vmul.f32 %v220, %v471
  %v488 = vmul.f32 %v225, %v472
  %vm489 = vcmask 7168
  %490 = vst.msk [vmem:[%s3] sm:$0xff] %vm489, %v473
  %491 = vst.msk [vmem:[%s3 + $0x8] sm:$0xff] %vm489, %v474
  %492 = vst.msk [vmem:[%s3 + $0x10] sm:$0xff] %vm489, %v475
  %493 = vst.msk [vmem:[%s3 + $0x18] sm:$0xff] %vm489, %v476
  %494 = vst.msk [vmem:[%s3 + $0x20] sm:$0xff] %vm489, %v477
  %495 = vst.msk [vmem:[%s3 + $0x28] sm:$0xff] %vm489, %v478
  %496 = vst.msk [vmem:[%s3 + $0x30] sm:$0xff] %vm489, %v479
  %497 = vst.msk [vmem:[%s3 + $0x38] sm:$0xff] %vm489, %v480
  %498 = vst.msk [vmem:[%s3 + $0x40] sm:$0xff] %vm489, %v481
  %499 = vst.msk [vmem:[%s3 + $0x48] sm:$0xff] %vm489, %v482
  %500 = vst.msk [vmem:[%s3 + $0x50] sm:$0xff] %vm489, %v483
  %501 = vst.msk [vmem:[%s3 + $0x58] sm:$0xff] %vm489, %v484
  %502 = vst.msk [vmem:[%s3 + $0x60] sm:$0xff] %vm489, %v485
  %503 = vst.msk [vmem:[%s3 + $0x68] sm:$0xff] %vm489, %v486
  %504 = vst.msk [vmem:[%s3 + $0x70] sm:$0xff] %vm489, %v487
  %505 = vst.msk [vmem:[%s3 + $0x78] sm:$0xff] %vm489, %v488
  // Predicated region
  $region14: #{tpu_custom_call.1} parent=0 // pred_check
    _
  $region15: #{tpu_custom_call.1} parent=0 // pred_check_branch
    %507 = sbr.rel (0) target = $region17
  $region16: #{tpu_custom_call.1} parent=0 // pred_region
    _
  $region17: #{tpu_custom_call.1} parent=0 // pred_fallthru
    _
  // Predicated region
  $region18: #{tpu_custom_call.1} parent=0 // pred_check
    _
  $region19: #{tpu_custom_call.1} parent=0 // pred_check_branch
    %509 = sbr.rel (0) target = $region21
  $region20: #{tpu_custom_call.1} parent=0 // pred_region
    _
  $region21: #{tpu_custom_call.1} parent=0 // pred_fallthru
    _

</llo_original>
